<compile_context>
chip_gen: v7x
topology: tpu7x:2x2x1
jax: 0.10.0
libtpu: 0.0.40
codegen_flags: <defaults>
</compile_context>

<pallas_src>
import jax
import jax.numpy as jnp
from jax import lax
from jax.experimental import pallas as pl
from jax.experimental.pallas import tpu as pltpu


def receiver_kernel(a_ref, sig_ref, out_ref):
    """One grid step: shared (G, V) fused-score matrix vs. a (V, block_b) slab.

    a_ref   : (G, V)         operand dtype  -- A = (x @ w1^T) @ w2, grid-invariant
    sig_ref : (V, block_b)   operand dtype  -- this block's signals, batch on lanes
    out_ref : (G, block_b)   out dtype      -- log-probs, game-major, lane-dense
    """
    # scores[g, b] = sum_v A[g, v] * signal[b, v]       (single MXU product,
    # operands already in (M, K) x (K, N) layout — no transposes, no casts)
    scores = lax.dot_general(
        a_ref[...], sig_ref[...],
        dimension_numbers=(((1,), (0,)), ((), ())),
        preferred_element_type=jnp.float32,
    )
    # Numerically-stable log-softmax over the game axis (axis 0), in float32.
    m = jnp.max(scores, axis=0, keepdims=True)
    shifted = scores - m
    lse = jnp.log(jnp.sum(jnp.exp(shifted), axis=0, keepdims=True))
    out_ref[...] = (shifted - lse).astype(out_ref.dtype)


def receiver_forward(signal, x, w1, w2, *, block_b=2048,
                     operand_dtype=jnp.float32, out_dtype=jnp.float32,
                     game_major_output=False):
    """Pallas forward of Receiver (reinforce=False).

    signal : (B, V) or (B, V, 1)   (B == 1 matches the PyTorch module exactly;
                                    B > 1 batches independent signals vs. one game)
    x      : (G, F)                game_size flattened feature vectors
    w1     : (E, F)                lin1.weight  (PyTorch (out, in) layout)
    w2     : (E, V)                lin2.weight
    returns: (B, G) log-probs over the game dimension (out_dtype), or (G, B)
             if game_major_output=True (skips the wrapper-side transpose).

    Correctness notes:
      * Folding lin1/lin2 into A = (x @ w1^T) @ w2 changes f32 summation order
        vs. the module's op order (benign at these magnitudes).
      * In the bf16 operand path, A is rounded once to bf16 (different error
        profile than quantizing w1/w2 separately) and softmax math stays f32.
      * Padded batch columns carry zero signals -> finite -log(G) log-probs,
        sliced off before returning (no NaN hazard).
    """
    if signal.ndim == 3:
        signal = jnp.squeeze(signal, axis=-1)
    signal = signal.astype(jnp.float32)
    x = x.astype(jnp.float32)
    G, F = x.shape
    B, V = signal.shape

    # Full algebraic fold of both linear layers (wrapper-side, tiny):
    #   A[g, v] = lin1(x[g]) . lin2_col(v) = ((x @ w1^T) @ w2)[g, v]
    a = (x @ w1.astype(jnp.float32).T) @ w2.astype(jnp.float32)      # (G, V)
    a_op = a.astype(operand_dtype)

    # Batch on the lane axis: transpose to (V, B) and pad B to a multiple of
    # the block so every input/output tile is lane-dense (full 128-lane vregs).
    sig_t = signal.astype(operand_dtype).T                           # (V, B)
    blk = max(128, min(int(block_b), 128 * pl.cdiv(B, 128)))
    blk = 128 * pl.cdiv(blk, 128)
    b_pad = blk * pl.cdiv(B, blk)
    if b_pad != B:
        sig_t = jnp.pad(sig_t, ((0, 0), (0, b_pad - B)))

    out_gm = pl.pallas_call(
        receiver_kernel,
        out_shape=jax.ShapeDtypeStruct((G, b_pad), out_dtype),
        grid_spec=pltpu.PrefetchScalarGridSpec(
            num_scalar_prefetch=0,
            grid=(b_pad // blk,),
            in_specs=[
                # Grid-invariant fused matrix: constant index map -> no re-DMA.
                pl.BlockSpec((G, V), lambda i: (0, 0)),
                # This block's signals, batch (lane) axis tiled by the grid.
                pl.BlockSpec((V, blk), lambda i: (0, i)),
            ],
            out_specs=pl.BlockSpec((G, blk), lambda i: (0, i)),
        ),
        compiler_params=pltpu.CompilerParams(
            # Grid steps are independent; "parallel" is near-neutral on
            # single-TC chips. A true v7x 2-TC split would need CORE_PARALLEL
            # and only pays off for very large B.
            dimension_semantics=("parallel",),
        ),
    )(a_op, sig_t)

    out_gm = out_gm[:, :B]
    if game_major_output:
        return out_gm                 # (G, B): no HBM round-trip transpose
    return out_gm.T                   # (B, G): module-parity layout


def receiver_forward_ref(signal, x, w1, w2):
    """Pure-JAX reference with the module's original (unfused) op order."""
    if signal.ndim == 3:
        signal = jnp.squeeze(signal, axis=-1)
    emb = x.astype(jnp.float32) @ w1.astype(jnp.float32).T       # (G, E)
    h_s = signal.astype(jnp.float32) @ w2.astype(jnp.float32).T  # (B, E)
    scores = h_s @ emb.T                                         # (B, G)
    return jax.nn.log_softmax(scores, axis=-1)


if __name__ == "__main__":
    # Small shapes consistent with the module.
    game_size = 8
    feat_size = 32
    embedding_size = 32
    vocab_size = 16

    key = jax.random.PRNGKey(0)
    k_x, k_sig, k_w1, k_w2 = jax.random.split(key, 4)

    # nn.Linear weights, (out_features, in_features) layout, no bias.
    w1 = jax.random.normal(k_w1, (embedding_size, feat_size), dtype=jnp.float32) * 0.1
    w2 = jax.random.normal(k_w2, (embedding_size, vocab_size), dtype=jnp.float32) * 0.1

    # Stack of game_size flattened feature vectors (the module's x[i].view(-1)).
    x = jax.random.normal(k_x, (game_size, feat_size), dtype=jnp.float32)

    # --- 1) Module-exact case: B=1 signal with a trailing singleton dim
    #        (exercises the squeeze path; torch.bmm in the original needs B=1).
    signal1 = jax.random.normal(k_sig, (1, vocab_size, 1), dtype=jnp.float32)
    out1 = jax.block_until_ready(receiver_forward(signal1, x, w1, w2))
    ref1 = receiver_forward_ref(signal1, x, w1, w2)
    assert out1.shape == (1, game_size)
    assert jnp.allclose(out1, ref1, atol=1e-5, rtol=1e-5), "B=1 f32 mismatch"

    # --- 2) Batched case, single fat grid step (block_b clamps to padded B).
    batch = 256
    signal_b = jax.random.normal(k_sig, (batch, vocab_size), dtype=jnp.float32)
    out_b = jax.block_until_ready(receiver_forward(signal_b, x, w1, w2))
    ref_b = receiver_forward_ref(signal_b, x, w1, w2)
    assert out_b.shape == (batch, game_size)
    assert jnp.allclose(out_b, ref_b, atol=1e-5, rtol=1e-5), "batched f32 mismatch"

    # --- 3) Multi-step grid with padding (B=257 @ block_b=128 -> 3 steps),
    #        plus the game-major output path (no wrapper transpose).
    batch3 = 257
    signal_3 = jax.random.normal(k_sig, (batch3, vocab_size), dtype=jnp.float32)
    out_gm3 = jax.block_until_ready(
        receiver_forward(signal_3, x, w1, w2, block_b=128, game_major_output=True))
    ref_3 = receiver_forward_ref(signal_3, x, w1, w2)
    assert out_gm3.shape == (game_size, batch3)
    assert jnp.allclose(out_gm3.T, ref_3, atol=1e-5, rtol=1e-5), "multi-step mismatch"

    # --- 4) bf16 operand path (f32 MXU accumulation + f32 softmax math) and
    #        bf16 output: halves input+output DMA bytes on v5e/v6e/v7x.
    out_bf16 = jax.block_until_ready(
        receiver_forward(signal_b, x, w1, w2,
                         operand_dtype=jnp.bfloat16, out_dtype=jnp.bfloat16))
    assert out_bf16.shape == (batch, game_size)
    assert jnp.allclose(out_bf16.astype(jnp.float32), ref_b,
                        atol=1e-1, rtol=1e-1), "bf16 path mismatch"

    print("KERNEL_OK")
</pallas_src>

<mosaic_0001>
module attributes {stable_mosaic.version = 11 : i64} {
  func.func @receiver_kernel(%arg0: i32, %arg1: memref<8x16xf32, #tpu.memory_space<vmem>>, %arg2: memref<16x128xf32, #tpu.memory_space<vmem>>, %arg3: memref<8x128xf32, #tpu.memory_space<vmem>>) attributes {dimension_semantics = [#tpu.dimension_semantics<parallel>], iteration_bounds = array<i64: 1>, scalar_prefetch = 0 : i64, scratch_operands = 0 : i64, tpu.core_type = #tpu.core_type<tc>, window_params = [{pipeline_mode = #tpu.pipeline_mode<synchronous>, transform_indices = @transform_0, window_bounds = array<i64: 8, 16>}, {transform_indices = @transform_1, window_bounds = array<i64: 16, 128>}, {transform_indices = @transform_2, window_bounds = array<i64: 8, 128>}]} {
    %c0 = arith.constant 0 : index
    %c0_0 = arith.constant 0 : index
    %0 = vector.load %arg1[%c0, %c0_0] : memref<8x16xf32, #tpu.memory_space<vmem>>, vector<8x16xf32>
    %c0_1 = arith.constant 0 : index
    %c0_2 = arith.constant 0 : index
    %1 = vector.load %arg2[%c0_1, %c0_2] : memref<16x128xf32, #tpu.memory_space<vmem>>, vector<16x128xf32>
    %cst = arith.constant dense<0.000000e+00> : vector<8x128xf32>
    %2 = tpu.matmul %0, %1, %cst {dimension_numbers = #tpu.dot_dimension_numbers<[1], [0], [0], [1], [0, 0, 1, 1], [], []>} : vector<8x16xf32>, vector<16x128xf32>, vector<8x128xf32> -> vector<8x128xf32>
    %cst_3 = arith.constant dense<0xFF800000> : vector<128xf32>
    %3 = vector.multi_reduction <maximumf>, %2, %cst_3 [0] : vector<8x128xf32> to vector<128xf32>
    %4 = vector.shape_cast %3 : vector<128xf32> to vector<1x128xf32>
    %5 = vector.broadcast %4 : vector<1x128xf32> to vector<8x128xf32>
    %6 = arith.subf %2, %5 : vector<8x128xf32>
    %7 = math.exp %6 : vector<8x128xf32>
    %cst_4 = arith.constant dense<0.000000e+00> : vector<128xf32>
    %8 = vector.multi_reduction <add>, %7, %cst_4 [0] : vector<8x128xf32> to vector<128xf32>
    %9 = vector.shape_cast %8 : vector<128xf32> to vector<1x128xf32>
    %10 = math.log %9 : vector<1x128xf32>
    %11 = vector.broadcast %10 : vector<1x128xf32> to vector<8x128xf32>
    %12 = arith.subf %6, %11 : vector<8x128xf32>
    %c0_5 = arith.constant 0 : index
    %c0_6 = arith.constant 0 : index
    %13 = vector.load %arg3[%c0_5, %c0_6] : memref<8x128xf32, #tpu.memory_space<vmem>>, vector<8x128xf32>
    tpu.vector_store %arg3[%c0_5, %c0_6], %12 {strides = array<i32>} : memref<8x128xf32, #tpu.memory_space<vmem>>, vector<8x128xf32>,
    return
  }
  func.func @transform_0(%arg0: i32) -> (i32, i32) {
    %c0_i32 = arith.constant 0 : i32
    %c0_i32_0 = arith.constant 0 : i32
    %c0_i32_1 = arith.constant 0 : i32
    return %c0_i32, %c0_i32_0 : i32, i32
  }
  func.func @transform_1(%arg0: i32) -> (i32, i32) {
    %c0_i32 = arith.constant 0 : i32
    %c0_i32_0 = arith.constant 0 : i32
    return %c0_i32, %arg0 : i32, i32
  }
  func.func @transform_2(%arg0: i32) -> (i32, i32) {
    %c0_i32 = arith.constant 0 : i32
    %c0_i32_0 = arith.constant 0 : i32
    return %c0_i32, %arg0 : i32, i32
  }
}

</mosaic_0001>

<llo_original>
// kernel: tpu_custom_call.1
$region0: #{tpu_custom_call.1}
  #allocation0 [shape = 'u32[]', space=smem, size = 0x4, offset = 0x4, fixed_abs, tag = 'smem constant byte address 0x4 - core index']
  #allocation1 [shape = 'u32[144,128]{1,0:T(1,128)}', space=vmem, size = 0x12000, scoped, tag = 'internal scratch']
  %s0 = inlined_call_operand.hbm [shape: f32[8,16], index: 0, kind: input, shape index: {}]
  %s1 = inlined_call_operand.hbm [shape: f32[16,128], index: 1, kind: input, shape index: {}]
  %s2 = inlined_call_operand.hbm [shape: f32[8,128], index: 2, kind: output, shape index: {}]
  %s3 = sld [smem:[#allocation0]]
  $region26: #{tpu_custom_call.1} parent=0
    _
  %s5 = ssub.s32 1, %s3
  %s6 = scalar_select 0, %s5, %s3
  $region1: #{tpu_custom_call.1} parent=0
    #allocation2 [shape = 'u8[4096]{0}', space=vmem, size = 0x1000, scoped, tag = 'input window, operand 0, single buffered']
    #allocation3 [shape = 's32[1]{0}', space=sflag, size = 0x4, scoped, tag = 'scoped memory for tpu_custom_call.1']
    #allocation4 [shape = 's32[1]{0}', space=sflag, size = 0x4, scoped, tag = 'scoped memory for tpu_custom_call.1']
    #allocation5 [shape = 'u8[8192]{0}', space=vmem, size = 0x2000, scoped, tag = 'input window, operand 1, single buffered']
    #allocation6 [shape = 's32[1]{0}', space=sflag, size = 0x4, scoped, tag = 'scoped memory for tpu_custom_call.1']
    #allocation7 [shape = 'u8[4096]{0}', space=vmem, size = 0x1000, scoped, tag = 'output window, operand 0, single buffered']
    %7 = vsyncpa [#allocation3], 0
    %8 = vsyncpa [#allocation6], 0
    %9 = vsyncpa [#allocation4], 0
    // Predicated region
    $region2: #{tpu_custom_call.1} parent=1 // pred_check
      _
    $region3: #{tpu_custom_call.1} parent=1 // pred_check_branch
      %11 = sbr.rel (0) target = $region5
    $region4: #{tpu_custom_call.1} parent=1 // pred_region
      %s13 = ssub.s32 128, 128
      %14 = vsyncadd [#allocation3], %s13
      %s16 = sshll.u32 [#allocation2], 4
      %s17 = int_to_ptr.vmem [resolvable:$true] %s16
      %19 = dma.hbm_to_vmem [thread:$0]  %s0, 128, %s17, [#allocation3]
    $region5: #{tpu_custom_call.1} parent=1 // pred_fallthru
      _
    // Predicated region
    $region6: #{tpu_custom_call.1} parent=1 // pred_check
      _
    $region7: #{tpu_custom_call.1} parent=1 // pred_check_branch
      %21 = sbr.rel (0) target = $region9
    $region8: #{tpu_custom_call.1} parent=1 // pred_region
      %s23 = ssub.s32 256, 256
      %24 = vsyncadd [#allocation6], %s23
      %s25 = sshll.u32 [#allocation5], 4
      %s26 = int_to_ptr.vmem [resolvable:$true] %s25
      %31 = dma.hbm_to_vmem [thread:$0]  %s1, 256, %s26, [#allocation6], 128, 128, 8
    $region9: #{tpu_custom_call.1} parent=1 // pred_fallthru
      _
    // Predicated region
    $region10: #{tpu_custom_call.1} parent=1 // pred_check
      _
    $region11: #{tpu_custom_call.1} parent=1 // pred_check_branch
      %33 = sbr.rel (0) target = $region13
    $region12: #{tpu_custom_call.1} parent=1 // pred_region
      %34 = dma.done [#allocation3], 128
    $region13: #{tpu_custom_call.1} parent=1 // pred_fallthru
      _
    // Predicated region
    $region14: #{tpu_custom_call.1} parent=1 // pred_check
      _
    $region15: #{tpu_custom_call.1} parent=1 // pred_check_branch
      %36 = sbr.rel (0) target = $region17
    $region16: #{tpu_custom_call.1} parent=1 // pred_region
      %37 = dma.done [#allocation6], 256
    $region17: #{tpu_custom_call.1} parent=1 // pred_fallthru
      _
    %v38 = vld [vmem:[#allocation2] sm:$0xff]
    %v39 = vld [vmem:[#allocation5] sm:$0xff]
    %v40 = vld [vmem:[#allocation5 + $0x8] sm:$0xff]
    %vm41 = vcmask 130048
    %v43 = vsel %vm41, %v38, 0
    %45 = vmatprep.subr.mxu0 0.0
    %46 = vmatpush1.msra.mxu0 %v39
    %47 = vmatprep.subr.mxu0 0.0
    %48 = vmatpush1.msra.mxu0 %v40
    %49 = vmatprep.subr.mxu0 0.0
    %50 = vmatpush1.msra.mxu0 0.0
    %51 = vmatprep.subr.mxu0 0.0
    %52 = vmatpush1.msra.mxu0 0.0
    %53 = vmatprep.subr.mxu0 0.0
    %54 = vmatpush1.msra.mxu0 0.0
    %55 = vmatprep.subr.mxu0 0.0
    %56 = vmatpush1.msra.mxu0 0.0
    %57 = vmatprep.subr.mxu0 0.0
    %58 = vmatpush1.msra.mxu0 0.0
    %59 = vmatprep.subr.mxu0 0.0
    %60 = vmatpush1.msra.mxu0 0.0
    %61 = vmatprep.subr.mxu0 0.0
    %62 = vmatpush1.msra.mxu0 0.0
    %63 = vmatprep.subr.mxu0 0.0
    %64 = vmatpush1.msra.mxu0 0.0
    %65 = vmatprep.subr.mxu0 0.0
    %66 = vmatpush1.msra.mxu0 0.0
    %67 = vmatprep.subr.mxu0 0.0
    %68 = vmatpush1.msra.mxu0 0.0
    %69 = vmatprep.subr.mxu0 0.0
    %70 = vmatpush1.msra.mxu0 0.0
    %71 = vmatprep.subr.mxu0 0.0
    %72 = vmatpush1.msra.mxu0 0.0
    %73 = vmatprep.subr.mxu0 0.0
    %74 = vmatpush1.msra.mxu0 0.0
    %75 = vmatprep.subr.mxu0 0.0
    %76 = vmatpush1.msra.mxu0 0.0
    %77 = vmatprep.subr.mxu0 0.0
    %78 = vmatpush1.msra.mxu0 0.0
    %79 = vmatprep.subr.mxu0 0.0
    %80 = vmatpush1.msra.mxu0 0.0
    %81 = vmatprep.subr.mxu0 0.0
    %82 = vmatpush1.msra.mxu0 0.0
    %83 = vmatprep.subr.mxu0 0.0
    %84 = vmatpush1.msra.mxu0 0.0
    %85 = vmatprep.subr.mxu0 0.0
    %86 = vmatpush1.msra.mxu0 0.0
    %87 = vmatprep.subr.mxu0 0.0
    %88 = vmatpush1.msra.mxu0 0.0
    %89 = vmatprep.subr.mxu0 0.0
    %90 = vmatpush1.msra.mxu0 0.0
    %91 = vmatprep.subr.mxu0 0.0
    %92 = vmatpush1.msra.mxu0 0.0
    %93 = vmatprep.subr.mxu0 0.0
    %94 = vmatpush1.msra.mxu0 0.0
    %95 = vmatprep.subr.mxu0 0.0
    %96 = vmatpush1.msra.mxu0 0.0
    %97 = vmatprep.subr.mxu0 0.0
    %98 = vmatpush1.msra.mxu0 0.0
    %99 = vmatprep.subr.mxu0 0.0
    %100 = vmatpush1.msra.mxu0 0.0
    %101 = vmatprep.subr.mxu0 0.0
    %102 = vmatpush1.msra.mxu0 0.0
    %103 = vmatprep.subr.mxu0 0.0
    %104 = vmatpush1.msra.mxu0 0.0
    %105 = vmatprep.subr.mxu0 0.0
    %106 = vmatpush1.msra.mxu0 0.0
    %107 = vmatprep.subr.mxu0 0.0
    %108 = vmatpush1.msra.mxu0 0.0
    %109 = vmatprep.mubr.f32.mxu0 0.0
    %110 = vmatmul.mubr.f32.gmra.mrb[0].mxu0 %v43
    %v111 = vpop.f32.mrb[0].mxu0
    %v112 = vadd.f32 0.0, %v111
    %v113 = vpop.f32.mrb[0].mxu0
    %114 = vdwg.mxu0
    %v115 = vrot.slane %v112, 4
    %v116 = vmax.f32 %v112, %v115
    %v117 = vrot.slane %v116, 2
    %v118 = vmax.f32 %v116, %v117
    %v119 = vrot.slane %v118, 1
    %v120 = vmax.f32 %v118, %v119
    %v121 = vsub.f32 %v112, %v120
    %v122 = vmul.f32 %v121, 1.442695
    %v123 = vpow.pop %v122
    %v124 = vrot.slane %v123, 4
    %v125 = vadd.f32 %v123, %v124
    %v126 = vrot.slane %v125, 2
    %v127 = vadd.f32 %v125, %v126
    %v128 = vrot.slane %v127, 1
    %v129 = vadd.f32 %v127, %v128
    %v130 = vlog2.pop %v129
    %v131 = vmul.f32 %v130, 0.6931472
    %v132 = vsub.f32 %v121, %v131
    %133 = vst [vmem:[#allocation7] sm:$0xff] %v132
    // Predicated region
    $region18: #{tpu_custom_call.1} parent=1 // pred_check
      _
    $region19: #{tpu_custom_call.1} parent=1 // pred_check_branch
      %135 = sbr.rel (0) target = $region21
    $region20: #{tpu_custom_call.1} parent=1 // pred_region
      %s137 = ssub.s32 128, 128
      %138 = vsyncadd [#allocation4], %s137
      %s140 = sshll.u32 [#allocation7], 4
      %s141 = int_to_ptr.vmem [resolvable:$true] %s140
      %143 = dma.vmem_to_hbm [thread:$0]  %s141, 128, %s2, [#allocation4]
    $region21: #{tpu_custom_call.1} parent=1 // pred_fallthru
      _
    // Predicated region
    $region22: #{tpu_custom_call.1} parent=1 // pred_check
      _
    $region23: #{tpu_custom_call.1} parent=1 // pred_check_branch
      %145 = sbr.rel (0) target = $region25
    $region24: #{tpu_custom_call.1} parent=1 // pred_region
      %146 = dma.done [#allocation4], 128
    $region25: #{tpu_custom_call.1} parent=1 // pred_fallthru
      _
    %147 = vsyncpa [#allocation3], 1
    %148 = vsyncpa [#allocation6], 1
    %149 = vsyncpa [#allocation4], 1

</llo_original>
